<compile_context>
chip_gen: v5e
topology: v5e:2x2
jax: 0.10.0
libtpu: 0.0.40
codegen_flags: <defaults>
</compile_context>

<pallas_src>
import jax
import jax.numpy as jnp
from jax.experimental import pallas as pl
from jax.experimental.pallas import tpu as pltpu


_UNROLL = 8  # gather-loop unroll factor; tile_b is always a multiple of this


def _round_up(x, m):
    return ((x + m - 1) // m) * m


def _vmem_capacity_bytes():
    """Physical per-core VMEM capacity; fall back to the v7x-safe 64 MiB."""
    try:
        cap = getattr(pltpu.get_tpu_info(), "vmem_capacity_bytes", None)
        if cap:
            return int(cap)
    except Exception:
        pass
    return 64 * 1024 * 1024


# --------------------------------------------------------------------------------------
# Fast path: both factor tables resident in VMEM, in-VMEM row gather (no per-row DMAs).
# --------------------------------------------------------------------------------------
def _vmem_gather_kernel(u_idx_ref, i_idx_ref,   # SMEM: scalar-prefetched indices, (b_pad,) i32
                        u_tbl_ref, i_tbl_ref,   # VMEM: full padded tables (constant block)
                        out_ref,                # VMEM: (1, tile_b) f32, lane-dense
                        u_buf, i_buf):          # VMEM scratch: (tile_b, F_pad) f32 x2
    tile_b = u_buf.shape[0]
    base = pl.multiple_of(pl.program_id(0) * tile_b, tile_b)

    # In-VMEM gather: each row is a couple of vector loads/stores (dynamic sublane slices).
    # Padded-tail rows gather row 0 (indices are zero-padded/clamped); their scores are
    # discarded by the wrapper's out[0, :B] slice.
    @pl.loop(0, tile_b // _UNROLL)
    def _(c):
        j0 = pl.multiple_of(c * _UNROLL, _UNROLL)
        for k in range(_UNROLL):            # unrolled: index loads overlap the vld/vst stream
            j = j0 + k
            u = u_idx_ref[base + j]
            it = i_idx_ref[base + j]
            u_buf[pl.ds(j, 1), :] = u_tbl_ref[pl.ds(u, 1), :]
            i_buf[pl.ds(j, 1), :] = i_tbl_ref[pl.ds(it, 1), :]

    # (user_row * item_row).sum(-1): biases are folded into the tables, zero pad columns
    # contribute nothing, so one VPU multiply + cross-lane reduce is the whole forward.
    pred = jnp.sum(u_buf[...] * i_buf[...], axis=1)
    out_ref[...] = pred.reshape(1, tile_b).astype(out_ref.dtype)


# --------------------------------------------------------------------------------------
# Fallback path: tables stay in HBM, per-row DMA gather with a single full-buffer drain.
# --------------------------------------------------------------------------------------
def _hbm_gather_kernel(u_idx_ref, i_idx_ref,    # SMEM: scalar-prefetched indices, (b_pad,) i32
                       u_tbl_hbm, i_tbl_hbm,    # HBM (pl.ANY): (n_users, F_pad), (n_items, F_pad)
                       out_ref,                 # VMEM: (1, tile_b) f32
                       u_buf, i_buf, sems):     # VMEM (tile_b, F_pad) f32 x2, DMA sems (2,)
    tile_b = u_buf.shape[0]
    base = pl.multiple_of(pl.program_id(0) * tile_b, tile_b)

    # Issue one row-gather DMA per example per table.  Chunk-unrolled so the scalar slots
    # compute the next row's index/address while the misc slot pushes the current descriptor.
    @pl.loop(0, tile_b // _UNROLL)
    def _(c):
        j0 = pl.multiple_of(c * _UNROLL, _UNROLL)
        for k in range(_UNROLL):
            j = j0 + k
            u = u_idx_ref[base + j]
            it = i_idx_ref[base + j]
            pltpu.make_async_copy(u_tbl_hbm.at[u], u_buf.at[j], sems.at[0]).start()
            pltpu.make_async_copy(i_tbl_hbm.at[it], i_buf.at[j], sems.at[1]).start()

    # Single drain per table: every row copy signals the same DMA semaphore and DMA
    # semaphores count bytes, so one wait sized like the whole (tile_b, F_pad) buffer
    # drains exactly the tile_b row copies (same idiom as the paged-attention kernel).
    pltpu.make_async_copy(u_buf, u_buf, sems.at[0]).wait()
    pltpu.make_async_copy(i_buf, i_buf, sems.at[1]).wait()

    pred = jnp.sum(u_buf[...] * i_buf[...], axis=1)
    out_ref[...] = pred.reshape(1, tile_b).astype(out_ref.dtype)
    # TODO(synk): cross-tile prefetch (double-buffered (2, tile_b, F_pad) scratch) would hide
    # the remaining gather latency, but it requires sequential ("arbitrary") grid semantics;
    # kept single-buffered so batch tiles stay independent and shard across TensorCores.


def _run_pallas(user_idx, item_idx, u_table, i_table, *, tile_b=512, force_hbm=False):
    """Gathered, bias-folded dot-product forward.  Returns (B,) f32 predictions."""
    B = int(user_idx.shape[0])
    n_users, F_pad = u_table.shape
    n_items = i_table.shape[0]

    # Clamp (no runtime OOB checks on VMEM/HBM refs) and pad the batch to the tile size.
    u = jnp.clip(user_idx.astype(jnp.int32), 0, n_users - 1)
    i = jnp.clip(item_idx.astype(jnp.int32), 0, n_items - 1)

    tile_b = min(tile_b, _round_up(max(B, 1), 128))   # don't over-tile tiny batches
    tile_b = _round_up(tile_b, 128)                   # lane-dense output blocks (>=128)
    assert tile_b % _UNROLL == 0
    num_tiles = pl.cdiv(B, tile_b)
    b_pad = num_tiles * tile_b
    # TODO(synk): whole-batch scalar prefetch pads SMEM to next_pow2(4*b_pad) per index
    # array; for very large batches (>~128K) switch to per-tile SMEM blocks.
    u = jnp.pad(u, (0, b_pad - B))   # padded tail gathers row 0; discarded by out[0, :B]
    i = jnp.pad(i, (0, b_pad - B))

    itemsize = 4  # f32 tables
    tables_bytes = (n_users + n_items) * F_pad * itemsize
    scratch_bytes = 2 * tile_b * F_pad * itemsize
    cap = _vmem_capacity_bytes()
    # Budget 2x for the table blocks (the pipeline may double-buffer them) plus gather
    # scratch, the double-buffered (1, tile_b) output tile and some slack.
    needed = 2 * tables_bytes + scratch_bytes + 4 * tile_b * itemsize + (2 << 20)
    use_vmem_tables = (not force_hbm) and needed <= (cap * 3) // 4

    out_spec = pl.BlockSpec((1, tile_b), lambda t, u_ref, i_ref: (0, t))
    if use_vmem_tables:
        grid_spec = pltpu.PrefetchScalarGridSpec(
            num_scalar_prefetch=2,
            grid=(num_tiles,),
            in_specs=[pl.BlockSpec((n_users, F_pad), lambda t, u_ref, i_ref: (0, 0)),
                      pl.BlockSpec((n_items, F_pad), lambda t, u_ref, i_ref: (0, 0))],
            out_specs=out_spec,
            scratch_shapes=[pltpu.VMEM((tile_b, F_pad), jnp.float32),
                            pltpu.VMEM((tile_b, F_pad), jnp.float32)],
        )
        kernel = _vmem_gather_kernel
        vmem_limit = max(needed, 32 << 20)
    else:
        grid_spec = pltpu.PrefetchScalarGridSpec(
            num_scalar_prefetch=2,
            grid=(num_tiles,),
            in_specs=[pl.BlockSpec(memory_space=pl.ANY),     # user table stays in HBM
                      pl.BlockSpec(memory_space=pl.ANY)],    # item table stays in HBM
            out_specs=out_spec,
            scratch_shapes=[pltpu.VMEM((tile_b, F_pad), jnp.float32),
                            pltpu.VMEM((tile_b, F_pad), jnp.float32),
                            pltpu.SemaphoreType.DMA((2,))],
        )
        kernel = _hbm_gather_kernel
        vmem_limit = 32 << 20
    vmem_limit = int(min(vmem_limit, max(cap - (4 << 20), 32 << 20)))

    out = pl.pallas_call(
        kernel,
        out_shape=jax.ShapeDtypeStruct((1, b_pad), jnp.float32),
        grid_spec=grid_spec,
        compiler_params=pltpu.CompilerParams(
            dimension_semantics=("parallel",),   # independent batch tiles -> megacore
            vmem_limit_bytes=vmem_limit,
        ),
    )(u, i, u_table, i_table)
    return out[0, :B]


class RecommendationEngineJAX:
    """JAX/Pallas port of the PyTorch RecommendationEngine forward pass."""

    def __init__(self, n_users, n_items, n_factors=20,
                 add_user_bias=False, add_product_bias=False, *, key):
        self.add_user_bias = add_user_bias
        self.add_product_bias = add_product_bias
        k1, k2, k3, k4 = jax.random.split(key, 4)
        # torch: weight.data.uniform_(0, 1) for factors, uniform_(0, 0.01) for biases
        self.user_factors = jax.random.uniform(k1, (n_users, n_factors), jnp.float32, 0.0, 1.0)
        self.item_factors = jax.random.uniform(k2, (n_items, n_factors), jnp.float32, 0.0, 1.0)
        self.user_biases = jax.random.uniform(k3, (n_users, 1), jnp.float32, 0.0, 0.01)
        self.item_biases = jax.random.uniform(k4, (n_items, 1), jnp.float32, 0.0, 0.01)

        # Replicate the original module's dispatch exactly.  The source has the self-AND
        # `if self.add_product_bias and self.add_product_bias:` so the effective routing is:
        #   add_product_bias=True -> _forward4 (user + item bias)
        #   elif add_user_bias    -> _forward2 (user bias only)
        #   else                  -> _forward1 (no bias)
        if add_product_bias:
            use_ub, use_ib = True, True
        elif add_user_bias:
            use_ub, use_ib = True, False
        else:
            use_ub, use_ib = False, False
        self._use_user_bias, self._use_item_bias = use_ub, use_ib

        # Fold biases into the factor tables ([bias, 1] on user rows, [1, bias] on item rows)
        # so the kernel's multiply+reduce yields the biased score directly.
        u_cols, i_cols = [self.user_factors], [self.item_factors]
        ones_u = jnp.ones((n_users, 1), jnp.float32)
        ones_i = jnp.ones((n_items, 1), jnp.float32)
        if use_ub:
            u_cols.append(self.user_biases)
            i_cols.append(ones_i)
        if use_ib:
            u_cols.append(ones_u)
            i_cols.append(self.item_biases)
        u_tab = jnp.concatenate(u_cols, axis=1) if len(u_cols) > 1 else self.user_factors
        i_tab = jnp.concatenate(i_cols, axis=1) if len(i_cols) > 1 else self.item_factors

        # Zero-pad feature columns to a multiple of 32 (128-byte-aligned rows, clean (8,128)
        # packing); zero columns contribute nothing to the dot product.
        f_eff = u_tab.shape[1]
        f_pad = _round_up(f_eff, 32)
        self._u_table = jnp.pad(u_tab, ((0, 0), (0, f_pad - f_eff)))
        self._i_table = jnp.pad(i_tab, ((0, 0), (0, f_pad - f_eff)))

    def forward(self, user, item, *, tile_b=512, force_hbm=False):
        # All dispatch variants reduce to one gathered multiply+sum on the folded tables.
        return _run_pallas(user, item, self._u_table, self._i_table,
                           tile_b=tile_b, force_hbm=force_hbm)

    # pure-JAX reference (uses the *unfolded* parameters) for correctness checking
    def forward_ref(self, user, item):
        uv = self.user_factors[user]
        iv = self.item_factors[item]
        pred = (uv * iv).sum(axis=1)
        if self._use_user_bias:
            pred = pred + self.user_biases[user, 0]
        if self._use_item_bias:
            pred = pred + self.item_biases[item, 0]
        return pred

    # TODO(synk): the PyTorch train() SGD loop is host-side training, not part of the
    # forward pass, and is intentionally not ported to a kernel.


if __name__ == "__main__":
    key = jax.random.PRNGKey(0)
    k_model, k_u, k_i, k_u2, k_i2 = jax.random.split(key, 5)

    n_users, n_items, n_factors, batch = 64, 48, 20, 8
    user = jax.random.randint(k_u, (batch,), 0, n_users, dtype=jnp.int32)
    item = jax.random.randint(k_i, (batch,), 0, n_items, dtype=jnp.int32)

    # no-bias path (_forward1), tables-in-VMEM fast path
    model = RecommendationEngineJAX(n_users, n_items, n_factors,
                                    add_user_bias=False, add_product_bias=False, key=k_model)
    out = jax.block_until_ready(model.forward(user, item))
    ref = model.forward_ref(user, item)
    assert out.shape == (batch,)
    assert jnp.allclose(out, ref, atol=1e-5, rtol=1e-5), (out, ref)

    # user-bias-only path (_forward2)
    model_u = RecommendationEngineJAX(n_users, n_items, n_factors,
                                      add_user_bias=True, add_product_bias=False, key=k_model)
    out_u = jax.block_until_ready(model_u.forward(user, item))
    assert jnp.allclose(out_u, model_u.forward_ref(user, item), atol=1e-5, rtol=1e-5)

    # both-biases path (_forward4, reached whenever add_product_bias=True)
    model_b = RecommendationEngineJAX(n_users, n_items, n_factors,
                                      add_user_bias=True, add_product_bias=True, key=k_model)
    out_b = jax.block_until_ready(model_b.forward(user, item))
    assert jnp.allclose(out_b, model_b.forward_ref(user, item), atol=1e-5, rtol=1e-5)

    # multi-tile batch with a ragged tail (exercises grid tiling + padded-tail discard)
    big_b = 300
    user_big = jax.random.randint(k_u2, (big_b,), 0, n_users, dtype=jnp.int32)
    item_big = jax.random.randint(k_i2, (big_b,), 0, n_items, dtype=jnp.int32)
    out_big = jax.block_until_ready(model_b.forward(user_big, item_big, tile_b=128))
    assert out_big.shape == (big_b,)
    assert jnp.allclose(out_big, model_b.forward_ref(user_big, item_big), atol=1e-5, rtol=1e-5)

    # HBM-gather fallback path (what runs when the tables do not fit in VMEM)
    out_hbm = jax.block_until_ready(model_b.forward(user, item, force_hbm=True))
    assert jnp.allclose(out_hbm, model_b.forward_ref(user, item), atol=1e-5, rtol=1e-5)

    print("KERNEL_OK")
</pallas_src>

<mosaic_0001>
module attributes {stable_mosaic.version = 11 : i64} {
  func.func @_vmem_gather_kernel(%arg0: i32, %arg1: memref<128xi32, #tpu.memory_space<smem>>, %arg2: memref<128xi32, #tpu.memory_space<smem>>, %arg3: memref<64x32xf32, #tpu.memory_space<vmem>>, %arg4: memref<48x32xf32, #tpu.memory_space<vmem>>, %arg5: memref<1x128xf32, #tpu.memory_space<vmem>>, %arg6: memref<128x32xf32, #tpu.memory_space<vmem>>, %arg7: memref<128x32xf32, #tpu.memory_space<vmem>>) attributes {dimension_semantics = [#tpu.dimension_semantics<parallel>], iteration_bounds = array<i64: 1>, scalar_prefetch = 2 : i64, scratch_operands = 2 : i64, tpu.core_type = #tpu.core_type<tc>, window_params = [{pipeline_mode = #tpu.pipeline_mode<synchronous>, transform_indices = @transform_0, window_bounds = array<i64: 64, 32>}, {pipeline_mode = #tpu.pipeline_mode<synchronous>, transform_indices = @transform_1, window_bounds = array<i64: 48, 32>}, {transform_indices = @transform_2, window_bounds = array<i64: 1, 128>}]} {
    %c128_i32 = arith.constant 128 : i32
    %0 = arith.muli %arg0, %c128_i32 : i32
    %1 = tpu.assume_multiple %0, 128 : i32
    %c0_i32 = arith.constant 0 : i32
    %c16_i32 = arith.constant 16 : i32
    %2 = arith.addi %c0_i32, %c16_i32 : i32
    %c1_i32 = arith.constant 1 : i32
    scf.for %arg8 = %c0_i32 to %2 step %c1_i32  : i32 {
      %c1_i32_6 = arith.constant 1 : i32
      %9 = arith.muli %arg8, %c1_i32_6 : i32
      %c0_i32_7 = arith.constant 0 : i32
      %10 = arith.addi %c0_i32_7, %9 : i32
      %c8_i32 = arith.constant 8 : i32
      %11 = arith.muli %10, %c8_i32 : i32
      %12 = tpu.assume_multiple %11, 8 : i32
      %c0_i32_8 = arith.constant 0 : i32
      %13 = arith.addi %12, %c0_i32_8 : i32
      %14 = arith.addi %1, %13 : i32
      %15 = arith.index_cast %14 : i32 to index
      %16 = memref.load %arg1[%15] : memref<128xi32, #tpu.memory_space<smem>>
      %17 = arith.addi %1, %13 : i32
      %18 = arith.index_cast %17 : i32 to index
      %19 = memref.load %arg2[%18] : memref<128xi32, #tpu.memory_space<smem>>
      %20 = arith.index_cast %16 : i32 to index
      %c0_9 = arith.constant 0 : index
      %21 = vector.load %arg3[%20, %c0_9] : memref<64x32xf32, #tpu.memory_space<vmem>>, vector<1x32xf32>
      %22 = arith.index_cast %13 : i32 to index
      %c0_10 = arith.constant 0 : index
      %23 = vector.load %arg6[%22, %c0_10] : memref<128x32xf32, #tpu.memory_space<vmem>>, vector<1x32xf32>
      tpu.vector_store %arg6[%22, %c0_10], %21 {strides = array<i32>} : memref<128x32xf32, #tpu.memory_space<vmem>>, vector<1x32xf32>,
      %24 = arith.index_cast %19 : i32 to index
      %c0_11 = arith.constant 0 : index
      %25 = vector.load %arg4[%24, %c0_11] : memref<48x32xf32, #tpu.memory_space<vmem>>, vector<1x32xf32>
      %26 = arith.index_cast %13 : i32 to index
      %c0_12 = arith.constant 0 : index
      %27 = vector.load %arg7[%26, %c0_12] : memref<128x32xf32, #tpu.memory_space<vmem>>, vector<1x32xf32>
      tpu.vector_store %arg7[%26, %c0_12], %25 {strides = array<i32>} : memref<128x32xf32, #tpu.memory_space<vmem>>, vector<1x32xf32>,
      %c1_i32_13 = arith.constant 1 : i32
      %28 = arith.addi %12, %c1_i32_13 : i32
      %29 = arith.addi %1, %28 : i32
      %30 = arith.index_cast %29 : i32 to index
      %31 = memref.load %arg1[%30] : memref<128xi32, #tpu.memory_space<smem>>
      %32 = arith.addi %1, %28 : i32
      %33 = arith.index_cast %32 : i32 to index
      %34 = memref.load %arg2[%33] : memref<128xi32, #tpu.memory_space<smem>>
      %35 = arith.index_cast %31 : i32 to index
      %c0_14 = arith.constant 0 : index
      %36 = vector.load %arg3[%35, %c0_14] : memref<64x32xf32, #tpu.memory_space<vmem>>, vector<1x32xf32>
      %37 = arith.index_cast %28 : i32 to index
      %c0_15 = arith.constant 0 : index
      %38 = vector.load %arg6[%37, %c0_15] : memref<128x32xf32, #tpu.memory_space<vmem>>, vector<1x32xf32>
      tpu.vector_store %arg6[%37, %c0_15], %36 {strides = array<i32>} : memref<128x32xf32, #tpu.memory_space<vmem>>, vector<1x32xf32>,
      %39 = arith.index_cast %34 : i32 to index
      %c0_16 = arith.constant 0 : index
      %40 = vector.load %arg4[%39, %c0_16] : memref<48x32xf32, #tpu.memory_space<vmem>>, vector<1x32xf32>
      %41 = arith.index_cast %28 : i32 to index
      %c0_17 = arith.constant 0 : index
      %42 = vector.load %arg7[%41, %c0_17] : memref<128x32xf32, #tpu.memory_space<vmem>>, vector<1x32xf32>
      tpu.vector_store %arg7[%41, %c0_17], %40 {strides = array<i32>} : memref<128x32xf32, #tpu.memory_space<vmem>>, vector<1x32xf32>,
      %c2_i32 = arith.constant 2 : i32
      %43 = arith.addi %12, %c2_i32 : i32
      %44 = arith.addi %1, %43 : i32
      %45 = arith.index_cast %44 : i32 to index
      %46 = memref.load %arg1[%45] : memref<128xi32, #tpu.memory_space<smem>>
      %47 = arith.addi %1, %43 : i32
      %48 = arith.index_cast %47 : i32 to index
      %49 = memref.load %arg2[%48] : memref<128xi32, #tpu.memory_space<smem>>
      %50 = arith.index_cast %46 : i32 to index
      %c0_18 = arith.constant 0 : index
      %51 = vector.load %arg3[%50, %c0_18] : memref<64x32xf32, #tpu.memory_space<vmem>>, vector<1x32xf32>
      %52 = arith.index_cast %43 : i32 to index
      %c0_19 = arith.constant 0 : index
      %53 = vector.load %arg6[%52, %c0_19] : memref<128x32xf32, #tpu.memory_space<vmem>>, vector<1x32xf32>
      tpu.vector_store %arg6[%52, %c0_19], %51 {strides = array<i32>} : memref<128x32xf32, #tpu.memory_space<vmem>>, vector<1x32xf32>,
      %54 = arith.index_cast %49 : i32 to index
      %c0_20 = arith.constant 0 : index
      %55 = vector.load %arg4[%54, %c0_20] : memref<48x32xf32, #tpu.memory_space<vmem>>, vector<1x32xf32>
      %56 = arith.index_cast %43 : i32 to index
      %c0_21 = arith.constant 0 : index
      %57 = vector.load %arg7[%56, %c0_21] : memref<128x32xf32, #tpu.memory_space<vmem>>, vector<1x32xf32>
      tpu.vector_store %arg7[%56, %c0_21], %55 {strides = array<i32>} : memref<128x32xf32, #tpu.memory_space<vmem>>, vector<1x32xf32>,
      %c3_i32 = arith.constant 3 : i32
      %58 = arith.addi %12, %c3_i32 : i32
      %59 = arith.addi %1, %58 : i32
      %60 = arith.index_cast %59 : i32 to index
      %61 = memref.load %arg1[%60] : memref<128xi32, #tpu.memory_space<smem>>
      %62 = arith.addi %1, %58 : i32
      %63 = arith.index_cast %62 : i32 to index
      %64 = memref.load %arg2[%63] : memref<128xi32, #tpu.memory_space<smem>>
      %65 = arith.index_cast %61 : i32 to index
      %c0_22 = arith.constant 0 : index
      %66 = vector.load %arg3[%65, %c0_22] : memref<64x32xf32, #tpu.memory_space<vmem>>, vector<1x32xf32>
      %67 = arith.index_cast %58 : i32 to index
      %c0_23 = arith.constant 0 : index
      %68 = vector.load %arg6[%67, %c0_23] : memref<128x32xf32, #tpu.memory_space<vmem>>, vector<1x32xf32>
      tpu.vector_store %arg6[%67, %c0_23], %66 {strides = array<i32>} : memref<128x32xf32, #tpu.memory_space<vmem>>, vector<1x32xf32>,
      %69 = arith.index_cast %64 : i32 to index
      %c0_24 = arith.constant 0 : index
      %70 = vector.load %arg4[%69, %c0_24] : memref<48x32xf32, #tpu.memory_space<vmem>>, vector<1x32xf32>
      %71 = arith.index_cast %58 : i32 to index
      %c0_25 = arith.constant 0 : index
      %72 = vector.load %arg7[%71, %c0_25] : memref<128x32xf32, #tpu.memory_space<vmem>>, vector<1x32xf32>
      tpu.vector_store %arg7[%71, %c0_25], %70 {strides = array<i32>} : memref<128x32xf32, #tpu.memory_space<vmem>>, vector<1x32xf32>,
      %c4_i32 = arith.constant 4 : i32
      %73 = arith.addi %12, %c4_i32 : i32
      %74 = arith.addi %1, %73 : i32
      %75 = arith.index_cast %74 : i32 to index
      %76 = memref.load %arg1[%75] : memref<128xi32, #tpu.memory_space<smem>>
      %77 = arith.addi %1, %73 : i32
      %78 = arith.index_cast %77 : i32 to index
      %79 = memref.load %arg2[%78] : memref<128xi32, #tpu.memory_space<smem>>
      %80 = arith.index_cast %76 : i32 to index
      %c0_26 = arith.constant 0 : index
      %81 = vector.load %arg3[%80, %c0_26] : memref<64x32xf32, #tpu.memory_space<vmem>>, vector<1x32xf32>
      %82 = arith.index_cast %73 : i32 to index
      %c0_27 = arith.constant 0 : index
      %83 = vector.load %arg6[%82, %c0_27] : memref<128x32xf32, #tpu.memory_space<vmem>>, vector<1x32xf32>
      tpu.vector_store %arg6[%82, %c0_27], %81 {strides = array<i32>} : memref<128x32xf32, #tpu.memory_space<vmem>>, vector<1x32xf32>,
      %84 = arith.index_cast %79 : i32 to index
      %c0_28 = arith.constant 0 : index
      %85 = vector.load %arg4[%84, %c0_28] : memref<48x32xf32, #tpu.memory_space<vmem>>, vector<1x32xf32>
      %86 = arith.index_cast %73 : i32 to index
      %c0_29 = arith.constant 0 : index
      %87 = vector.load %arg7[%86, %c0_29] : memref<128x32xf32, #tpu.memory_space<vmem>>, vector<1x32xf32>
      tpu.vector_store %arg7[%86, %c0_29], %85 {strides = array<i32>} : memref<128x32xf32, #tpu.memory_space<vmem>>, vector<1x32xf32>,
      %c5_i32 = arith.constant 5 : i32
      %88 = arith.addi %12, %c5_i32 : i32
      %89 = arith.addi %1, %88 : i32
      %90 = arith.index_cast %89 : i32 to index
      %91 = memref.load %arg1[%90] : memref<128xi32, #tpu.memory_space<smem>>
      %92 = arith.addi %1, %88 : i32
      %93 = arith.index_cast %92 : i32 to index
      %94 = memref.load %arg2[%93] : memref<128xi32, #tpu.memory_space<smem>>
      %95 = arith.index_cast %91 : i32 to index
      %c0_30 = arith.constant 0 : index
      %96 = vector.load %arg3[%95, %c0_30] : memref<64x32xf32, #tpu.memory_space<vmem>>, vector<1x32xf32>
      %97 = arith.index_cast %88 : i32 to index
      %c0_31 = arith.constant 0 : index
      %98 = vector.load %arg6[%97, %c0_31] : memref<128x32xf32, #tpu.memory_space<vmem>>, vector<1x32xf32>
      tpu.vector_store %arg6[%97, %c0_31], %96 {strides = array<i32>} : memref<128x32xf32, #tpu.memory_space<vmem>>, vector<1x32xf32>,
      %99 = arith.index_cast %94 : i32 to index
      %c0_32 = arith.constant 0 : index
      %100 = vector.load %arg4[%99, %c0_32] : memref<48x32xf32, #tpu.memory_space<vmem>>, vector<1x32xf32>
      %101 = arith.index_cast %88 : i32 to index
      %c0_33 = arith.constant 0 : index
      %102 = vector.load %arg7[%101, %c0_33] : memref<128x32xf32, #tpu.memory_space<vmem>>, vector<1x32xf32>
      tpu.vector_store %arg7[%101, %c0_33], %100 {strides = array<i32>} : memref<128x32xf32, #tpu.memory_space<vmem>>, vector<1x32xf32>,
      %c6_i32 = arith.constant 6 : i32
      %103 = arith.addi %12, %c6_i32 : i32
      %104 = arith.addi %1, %103 : i32
      %105 = arith.index_cast %104 : i32 to index
      %106 = memref.load %arg1[%105] : memref<128xi32, #tpu.memory_space<smem>>
      %107 = arith.addi %1, %103 : i32
      %108 = arith.index_cast %107 : i32 to index
      %109 = memref.load %arg2[%108] : memref<128xi32, #tpu.memory_space<smem>>
      %110 = arith.index_cast %106 : i32 to index
      %c0_34 = arith.constant 0 : index
      %111 = vector.load %arg3[%110, %c0_34] : memref<64x32xf32, #tpu.memory_space<vmem>>, vector<1x32xf32>
      %112 = arith.index_cast %103 : i32 to index
      %c0_35 = arith.constant 0 : index
      %113 = vector.load %arg6[%112, %c0_35] : memref<128x32xf32, #tpu.memory_space<vmem>>, vector<1x32xf32>
      tpu.vector_store %arg6[%112, %c0_35], %111 {strides = array<i32>} : memref<128x32xf32, #tpu.memory_space<vmem>>, vector<1x32xf32>,
      %114 = arith.index_cast %109 : i32 to index
      %c0_36 = arith.constant 0 : index
      %115 = vector.load %arg4[%114, %c0_36] : memref<48x32xf32, #tpu.memory_space<vmem>>, vector<1x32xf32>
      %116 = arith.index_cast %103 : i32 to index
      %c0_37 = arith.constant 0 : index
      %117 = vector.load %arg7[%116, %c0_37] : memref<128x32xf32, #tpu.memory_space<vmem>>, vector<1x32xf32>
      tpu.vector_store %arg7[%116, %c0_37], %115 {strides = array<i32>} : memref<128x32xf32, #tpu.memory_space<vmem>>, vector<1x32xf32>,
      %c7_i32 = arith.constant 7 : i32
      %118 = arith.addi %12, %c7_i32 : i32
      %119 = arith.addi %1, %118 : i32
      %120 = arith.index_cast %119 : i32 to index
      %121 = memref.load %arg1[%120] : memref<128xi32, #tpu.memory_space<smem>>
      %122 = arith.addi %1, %118 : i32
      %123 = arith.index_cast %122 : i32 to index
      %124 = memref.load %arg2[%123] : memref<128xi32, #tpu.memory_space<smem>>
      %125 = arith.index_cast %121 : i32 to index
      %c0_38 = arith.constant 0 : index
      %126 = vector.load %arg3[%125, %c0_38] : memref<64x32xf32, #tpu.memory_space<vmem>>, vector<1x32xf32>
      %127 = arith.index_cast %118 : i32 to index
      %c0_39 = arith.constant 0 : index
      %128 = vector.load %arg6[%127, %c0_39] : memref<128x32xf32, #tpu.memory_space<vmem>>, vector<1x32xf32>
      tpu.vector_store %arg6[%127, %c0_39], %126 {strides = array<i32>} : memref<128x32xf32, #tpu.memory_space<vmem>>, vector<1x32xf32>,
      %129 = arith.index_cast %124 : i32 to index
      %c0_40 = arith.constant 0 : index
      %130 = vector.load %arg4[%129, %c0_40] : memref<48x32xf32, #tpu.memory_space<vmem>>, vector<1x32xf32>
      %131 = arith.index_cast %118 : i32 to index
      %c0_41 = arith.constant 0 : index
      %132 = vector.load %arg7[%131, %c0_41] : memref<128x32xf32, #tpu.memory_space<vmem>>, vector<1x32xf32>
      tpu.vector_store %arg7[%131, %c0_41], %130 {strides = array<i32>} : memref<128x32xf32, #tpu.memory_space<vmem>>, vector<1x32xf32>,
    }
    %c16_i32_0 = arith.constant 16 : i32
    %c0 = arith.constant 0 : index
    %c0_1 = arith.constant 0 : index
    %3 = vector.load %arg6[%c0, %c0_1] : memref<128x32xf32, #tpu.memory_space<vmem>>, vector<128x32xf32>
    %c0_2 = arith.constant 0 : index
    %c0_3 = arith.constant 0 : index
    %4 = vector.load %arg7[%c0_2, %c0_3] : memref<128x32xf32, #tpu.memory_space<vmem>>, vector<128x32xf32>
    %5 = arith.mulf %3, %4 : vector<128x32xf32>
    %cst = arith.constant dense<0.000000e+00> : vector<128xf32>
    %6 = vector.multi_reduction <add>, %5, %cst [1] : vector<128x32xf32> to vector<128xf32>
    %7 = vector.shape_cast %6 : vector<128xf32> to vector<1x128xf32>
    %c0_4 = arith.constant 0 : index
    %c0_5 = arith.constant 0 : index
    %8 = vector.load %arg5[%c0_4, %c0_5] : memref<1x128xf32, #tpu.memory_space<vmem>>, vector<1x128xf32>
    tpu.vector_store %arg5[%c0_4, %c0_5], %7 {strides = array<i32>} : memref<1x128xf32, #tpu.memory_space<vmem>>, vector<1x128xf32>,
    return
  }
  func.func @transform_0(%arg0: i32, %arg1: memref<128xi32, #tpu.memory_space<smem>>, %arg2: memref<128xi32, #tpu.memory_space<smem>>) -> (i32, i32) {
    %c0_i32 = arith.constant 0 : i32
    %c0_i32_0 = arith.constant 0 : i32
    %c0_i32_1 = arith.constant 0 : i32
    return %c0_i32, %c0_i32_0 : i32, i32
  }
  func.func @transform_1(%arg0: i32, %arg1: memref<128xi32, #tpu.memory_space<smem>>, %arg2: memref<128xi32, #tpu.memory_space<smem>>) -> (i32, i32) {
    %c0_i32 = arith.constant 0 : i32
    %c0_i32_0 = arith.constant 0 : i32
    %c0_i32_1 = arith.constant 0 : i32
    return %c0_i32, %c0_i32_0 : i32, i32
  }
  func.func @transform_2(%arg0: i32, %arg1: memref<128xi32, #tpu.memory_space<smem>>, %arg2: memref<128xi32, #tpu.memory_space<smem>>) -> (i32, i32) {
    %c0_i32 = arith.constant 0 : i32
    %c0_i32_0 = arith.constant 0 : i32
    return %c0_i32, %arg0 : i32, i32
  }
}

</mosaic_0001>

<llo_original>
// kernel: tpu_custom_call.1
$region0: #{tpu_custom_call.1}
  #allocation0 [shape = 'u32[]', space=smem, size = 0x4, offset = 0x4, fixed_abs, tag = 'smem constant byte address 0x4 - core index']
  #allocation1 [shape = 'u32[72,128]{1,0:T(1,128)}', space=vmem, size = 0x9000, scoped, tag = 'internal scratch']
  #allocation2 [shape = 'f32[128,32]{1,0:T(8,128)}', space=vmem, size = 0x10000, scoped, tag = 'scratch operand']
  #allocation3 [shape = 'f32[128,32]{1,0:T(8,128)}', space=vmem, size = 0x10000, scoped, tag = 'scratch operand']
  #allocation4 [shape = 's32[1]{0}', space=sflag, size = 0x4, scoped, tag = 'scoped memory for tpu_custom_call.1']
  #allocation5 [shape = 'u8[512]{0}', space=smem, size = 0x200, scoped, tag = 'prefetched SMEM operand 0']
  #allocation6 [shape = 'u8[512]{0}', space=smem, size = 0x200, scoped, tag = 'prefetched SMEM operand 1']
  %s0 = inlined_call_operand.vmem [shape: s32[128], index: 0, kind: input, shape index: {}]
  %s1 = inlined_call_operand.vmem [shape: s32[128], index: 1, kind: input, shape index: {}]
  %s2 = inlined_call_operand.vmem [shape: f32[64,32], index: 2, kind: input, shape index: {}]
  %s3 = inlined_call_operand.vmem [shape: f32[48,32], index: 3, kind: input, shape index: {}]
  %s4 = inlined_call_operand.hbm [shape: f32[1,128], index: 4, kind: output, shape index: {}]
  %s5 = sld [smem:[#allocation0]]
  $region25: #{tpu_custom_call.1} parent=0
    _
  %s7 = ssub.s32 1, %s5
  %s8 = scalar_select 0, %s7, %s5
  %s10 = sshll.u32 %s0, 4
  %s11 = int_to_ptr.vmem [resolvable:$true] %s10
  %13 = dma.vmem_to_smem %s11, 16, [#allocation5], [#allocation4]
  %s15 = sshll.u32 %s1, 4
  %s16 = int_to_ptr.vmem [resolvable:$true] %s15
  %18 = dma.vmem_to_smem %s16, 16, [#allocation6], [#allocation4]
  %20 = dma.done [#allocation4], 32
  %21 = sfence
  $region1: #{tpu_custom_call.1} parent=0
    #allocation7 [shape = 'u8[512]{0}', space=vmem, size = 0x400, scoped, tag = 'output window, operand 0, single buffered']
    #allocation8 [shape = 's32[1]{0}', space=sflag, size = 0x4, scoped, tag = 'scoped memory for tpu_custom_call.1']
    %22 = vsyncpa [#allocation8], 0
    // Predicated region
    $region2: #{tpu_custom_call.1} parent=1 // pred_check
      _
    $region3: #{tpu_custom_call.1} parent=1 // pred_check_branch
      %24 = sbr.rel (0) target = $region5
    $region4: #{tpu_custom_call.1} parent=1 // pred_region
      _
    $region5: #{tpu_custom_call.1} parent=1 // pred_fallthru
      _
    // Predicated region
    $region6: #{tpu_custom_call.1} parent=1 // pred_check
      _
    $region7: #{tpu_custom_call.1} parent=1 // pred_check_branch
      %26 = sbr.rel (0) target = $region9
    $region8: #{tpu_custom_call.1} parent=1 // pred_region
      _
    $region9: #{tpu_custom_call.1} parent=1 // pred_fallthru
      _
    %s27 = smul.u32 0, 128
    loop: start=0, step=1, limit=16
    $region10: #{tpu_custom_call.1} parent=1 // loop_pre_header
      _
    $region11: #{tpu_custom_call.1} parent=1 // loop_header
      %s29 = sphi 0, %s33
      %p30 = scmp.ge.s32.totalorder %s29, 16
    $region12: #{tpu_custom_call.1} parent=1 // loop_header_branch
      %32 = sbr.rel (%p30) target = $region16
    $region13: #{tpu_custom_call.1} parent=1 // loop_body
      %s34 = smul.u32 %s29, 8
      %s35 = sadd.s32 %s27, %s34
      %s36 = sld [smem:[#allocation5 + %s35]]
      %s37 = sld [smem:[#allocation6 + %s35]]
      %s38 = scalar_lea.vmem %s2, %s36
      %v39 = vld [vmem:[%s38] sm:$0x1]
      %s40 = scalar_lea.vmem [#allocation2], %s34
      %vm41 = vcmask 253952
      %42 = vst.msk [vmem:[%s40] sm:$0x1] %vm41, %v39
      %s43 = scalar_lea.vmem %s3, %s37
      %v44 = vld [vmem:[%s43] sm:$0x1]
      %s45 = scalar_lea.vmem [#allocation3], %s34
      %46 = vst.msk [vmem:[%s45] sm:$0x1] %vm41, %v44
      %s47 = sadd.s32 %s34, 1
      %s48 = sadd.s32 %s27, %s47
      %s49 = sld [smem:[#allocation5 + %s48]]
      %s50 = sld [smem:[#allocation6 + %s48]]
      %s51 = scalar_lea.vmem %s2, %s49
      %v52 = vld [vmem:[%s51] sm:$0x1]
      %s53 = scalar_lea.vmem [#allocation2], %s47
      %54 = vst.msk [vmem:[%s53] sm:$0x1] %vm41, %v52
      %s55 = scalar_lea.vmem %s3, %s50
      %v56 = vld [vmem:[%s55] sm:$0x1]
      %s57 = scalar_lea.vmem [#allocation3], %s47
      %58 = vst.msk [vmem:[%s57] sm:$0x1] %vm41, %v56
      %s59 = sadd.s32 %s34, 2
      %s60 = sadd.s32 %s27, %s59
      %s61 = sld [smem:[#allocation5 + %s60]]
      %s62 = sld [smem:[#allocation6 + %s60]]
      %s63 = scalar_lea.vmem %s2, %s61
      %v64 = vld [vmem:[%s63] sm:$0x1]
      %s65 = scalar_lea.vmem [#allocation2], %s59
      %66 = vst.msk [vmem:[%s65] sm:$0x1] %vm41, %v64
      %s67 = scalar_lea.vmem %s3, %s62
      %v68 = vld [vmem:[%s67] sm:$0x1]
      %s69 = scalar_lea.vmem [#allocation3], %s59
      %70 = vst.msk [vmem:[%s69] sm:$0x1] %vm41, %v68
      %s71 = sadd.s32 %s34, 3
      %s72 = sadd.s32 %s27, %s71
      %s73 = sld [smem:[#allocation5 + %s72]]
      %s74 = sld [smem:[#allocation6 + %s72]]
      %s75 = scalar_lea.vmem %s2, %s73
      %v76 = vld [vmem:[%s75] sm:$0x1]
      %s77 = scalar_lea.vmem [#allocation2], %s71
      %78 = vst.msk [vmem:[%s77] sm:$0x1] %vm41, %v76
      %s79 = scalar_lea.vmem %s3, %s74
      %v80 = vld [vmem:[%s79] sm:$0x1]
      %s81 = scalar_lea.vmem [#allocation3], %s71
      %82 = vst.msk [vmem:[%s81] sm:$0x1] %vm41, %v80
      %s83 = sadd.s32 %s34, 4
      %s84 = sadd.s32 %s27, %s83
      %s85 = sld [smem:[#allocation5 + %s84]]
      %s86 = sld [smem:[#allocation6 + %s84]]
      %s87 = scalar_lea.vmem %s2, %s85
      %v88 = vld [vmem:[%s87] sm:$0x1]
      %s89 = scalar_lea.vmem [#allocation2], %s83
      %90 = vst.msk [vmem:[%s89] sm:$0x1] %vm41, %v88
      %s91 = scalar_lea.vmem %s3, %s86
      %v92 = vld [vmem:[%s91] sm:$0x1]
      %s93 = scalar_lea.vmem [#allocation3], %s83
      %94 = vst.msk [vmem:[%s93] sm:$0x1] %vm41, %v92
      %s95 = sadd.s32 %s34, 5
      %s96 = sadd.s32 %s27, %s95
      %s97 = sld [smem:[#allocation5 + %s96]]
      %s98 = sld [smem:[#allocation6 + %s96]]
      %s99 = scalar_lea.vmem %s2, %s97
      %v100 = vld [vmem:[%s99] sm:$0x1]
      %s101 = scalar_lea.vmem [#allocation2], %s95
      %102 = vst.msk [vmem:[%s101] sm:$0x1] %vm41, %v100
      %s103 = scalar_lea.vmem %s3, %s98
      %v104 = vld [vmem:[%s103] sm:$0x1]
      %s105 = scalar_lea.vmem [#allocation3], %s95
      %106 = vst.msk [vmem:[%s105] sm:$0x1] %vm41, %v104
      %s107 = sadd.s32 %s34, 6
      %s108 = sadd.s32 %s27, %s107
      %s109 = sld [smem:[#allocation5 + %s108]]
      %s110 = sld [smem:[#allocation6 + %s108]]
      %s111 = scalar_lea.vmem %s2, %s109
      %v112 = vld [vmem:[%s111] sm:$0x1]
      %s113 = scalar_lea.vmem [#allocation2], %s107
      %114 = vst.msk [vmem:[%s113] sm:$0x1] %vm41, %v112
      %s115 = scalar_lea.vmem %s3, %s110
      %v116 = vld [vmem:[%s115] sm:$0x1]
      %s117 = scalar_lea.vmem [#allocation3], %s107
      %118 = vst.msk [vmem:[%s117] sm:$0x1] %vm41, %v116
      %s119 = sadd.s32 %s34, 7
      %s120 = sadd.s32 %s27, %s119
      %s121 = sld [smem:[#allocation5 + %s120]]
      %s122 = sld [smem:[#allocation6 + %s120]]
      %s123 = scalar_lea.vmem %s2, %s121
      %v124 = vld [vmem:[%s123] sm:$0x1]
      %s125 = scalar_lea.vmem [#allocation2], %s119
      %126 = vst.msk [vmem:[%s125] sm:$0x1] %vm41, %v124
      %s127 = scalar_lea.vmem %s3, %s122
      %v128 = vld [vmem:[%s127] sm:$0x1]
      %s129 = scalar_lea.vmem [#allocation3], %s119
      %130 = vst.msk [vmem:[%s129] sm:$0x1] %vm41, %v128
    $region14: #{tpu_custom_call.1} parent=1 // loop_footer
      %s33 = sadd.s32 1, %s29
    $region15: #{tpu_custom_call.1} parent=1 // loop_footer_branch
      %28 = sbr.rel target = $region11
    $region16: #{tpu_custom_call.1} parent=1 // loop_exit
      _
    %v131 = vld [vmem:[#allocation2] sm:$0xff]
    %v132 = vld [vmem:[#allocation2 + $0x8] sm:$0xff]
    %v133 = vld [vmem:[#allocation2 + $0x10] sm:$0xff]
    %v134 = vld [vmem:[#allocation2 + $0x18] sm:$0xff]
    %v135 = vld [vmem:[#allocation2 + $0x20] sm:$0xff]
    %v136 = vld [vmem:[#allocation2 + $0x28] sm:$0xff]
    %v137 = vld [vmem:[#allocation2 + $0x30] sm:$0xff]
    %v138 = vld [vmem:[#allocation2 + $0x38] sm:$0xff]
    %v139 = vld [vmem:[#allocation2 + $0x40] sm:$0xff]
    %v140 = vld [vmem:[#allocation2 + $0x48] sm:$0xff]
    %v141 = vld [vmem:[#allocation2 + $0x50] sm:$0xff]
    %v142 = vld [vmem:[#allocation2 + $0x58] sm:$0xff]
    %v143 = vld [vmem:[#allocation2 + $0x60] sm:$0xff]
    %v144 = vld [vmem:[#allocation2 + $0x68] sm:$0xff]
    %v145 = vld [vmem:[#allocation2 + $0x70] sm:$0xff]
    %v146 = vld [vmem:[#allocation2 + $0x78] sm:$0xff]
    %v147 = vld [vmem:[#allocation3] sm:$0xff]
    %v148 = vld [vmem:[#allocation3 + $0x8] sm:$0xff]
    %v149 = vld [vmem:[#allocation3 + $0x10] sm:$0xff]
    %v150 = vld [vmem:[#allocation3 + $0x18] sm:$0xff]
    %v151 = vld [vmem:[#allocation3 + $0x20] sm:$0xff]
    %v152 = vld [vmem:[#allocation3 + $0x28] sm:$0xff]
    %v153 = vld [vmem:[#allocation3 + $0x30] sm:$0xff]
    %v154 = vld [vmem:[#allocation3 + $0x38] sm:$0xff]
    %v155 = vld [vmem:[#allocation3 + $0x40] sm:$0xff]
    %v156 = vld [vmem:[#allocation3 + $0x48] sm:$0xff]
    %v157 = vld [vmem:[#allocation3 + $0x50] sm:$0xff]
    %v158 = vld [vmem:[#allocation3 + $0x58] sm:$0xff]
    %v159 = vld [vmem:[#allocation3 + $0x60] sm:$0xff]
    %v160 = vld [vmem:[#allocation3 + $0x68] sm:$0xff]
    %v161 = vld [vmem:[#allocation3 + $0x70] sm:$0xff]
    %v162 = vld [vmem:[#allocation3 + $0x78] sm:$0xff]
    %v163 = vmul.f32 %v131, %v147
    %v164 = vmul.f32 %v132, %v148
    %v165 = vmul.f32 %v133, %v149
    %v166 = vmul.f32 %v134, %v150
    %v167 = vmul.f32 %v135, %v151
    %v168 = vmul.f32 %v136, %v152
    %v169 = vmul.f32 %v137, %v153
    %v170 = vmul.f32 %v138, %v154
    %v171 = vmul.f32 %v139, %v155
    %v172 = vmul.f32 %v140, %v156
    %v173 = vmul.f32 %v141, %v157
    %v174 = vmul.f32 %v142, %v158
    %v175 = vmul.f32 %v143, %v159
    %v176 = vmul.f32 %v144, %v160
    %v177 = vmul.f32 %v145, %v161
    %v178 = vmul.f32 %v146, %v162
    %vm179 = vcmask 261120
    %v180 = vsel %vm179, %v163, 0.0
    %181 = vadd.xlane.f32.xlu0 %v180
    %v182 = vpop.xlane.xlu0 %181
    %v183 = vsel %vm179, %v164, 0.0
    %184 = vadd.xlane.f32.xlu0 %v183
    %v185 = vpop.xlane.xlu0 %184
    %v186 = vsel %vm179, %v165, 0.0
    %187 = vadd.xlane.f32.xlu0 %v186
    %v188 = vpop.xlane.xlu0 %187
    %v189 = vsel %vm179, %v166, 0.0
    %190 = vadd.xlane.f32.xlu0 %v189
    %v191 = vpop.xlane.xlu0 %190
    %v192 = vsel %vm179, %v167, 0.0
    %193 = vadd.xlane.f32.xlu0 %v192
    %v194 = vpop.xlane.xlu0 %193
    %v195 = vsel %vm179, %v168, 0.0
    %196 = vadd.xlane.f32.xlu0 %v195
    %v197 = vpop.xlane.xlu0 %196
    %v198 = vsel %vm179, %v169, 0.0
    %199 = vadd.xlane.f32.xlu0 %v198
    %v200 = vpop.xlane.xlu0 %199
    %v201 = vsel %vm179, %v170, 0.0
    %202 = vadd.xlane.f32.xlu0 %v201
    %v203 = vpop.xlane.xlu0 %202
    %v204 = vsel %vm179, %v171, 0.0
    %205 = vadd.xlane.f32.xlu0 %v204
    %v206 = vpop.xlane.xlu0 %205
    %v207 = vsel %vm179, %v172, 0.0
    %208 = vadd.xlane.f32.xlu0 %v207
    %v209 = vpop.xlane.xlu0 %208
    %v210 = vsel %vm179, %v173, 0.0
    %211 = vadd.xlane.f32.xlu0 %v210
    %v212 = vpop.xlane.xlu0 %211
    %v213 = vsel %vm179, %v174, 0.0
    %214 = vadd.xlane.f32.xlu0 %v213
    %v215 = vpop.xlane.xlu0 %214
    %v216 = vsel %vm179, %v175, 0.0
    %217 = vadd.xlane.f32.xlu0 %v216
    %v218 = vpop.xlane.xlu0 %217
    %v219 = vsel %vm179, %v176, 0.0
    %220 = vadd.xlane.f32.xlu0 %v219
    %v221 = vpop.xlane.xlu0 %220
    %v222 = vsel %vm179, %v177, 0.0
    %223 = vadd.xlane.f32.xlu0 %v222
    %v224 = vpop.xlane.xlu0 %223
    %v225 = vsel %vm179, %v178, 0.0
    %226 = vadd.xlane.f32.xlu0 %v225
    %v227 = vpop.xlane.xlu0 %226
    %v244 = vlaneseq
    %v245 = vand.u32 %v244, 127
    %v246 = vperm.slane %v182, %v245
    %v247 = vadd.s32 %v245, 4294967288
    %v248 = vperm.slane %v185, %v247
    %vm249 = vcmask 130112
    %v250 = vsel %vm249, %v248, %v246
    %v251 = vadd.s32 %v245, 4294967280
    %v252 = vperm.slane %v188, %v251
    %vm253 = vcmask 195712
    %v254 = vsel %vm253, %v252, %v250
    %v255 = vadd.s32 %v245, 4294967272
    %v256 = vperm.slane %v191, %v255
    %vm257 = vcmask 261312
    %v258 = vsel %vm257, %v256, %v254
    %v259 = vadd.s32 %v245, 4294967264
    %v260 = vperm.slane %v194, %v259
    %vm261 = vcmask 326912
    %v262 = vsel %vm261, %v260, %v258
    %v263 = vadd.s32 %v245, 4294967256
    %v264 = vperm.slane %v197, %v263
    %vm265 = vcmask 392512
    %v266 = vsel %vm265, %v264, %v262
    %v267 = vadd.s32 %v245, 4294967248
    %v268 = vperm.slane %v200, %v267
    %vm269 = vcmask 458112
    %v270 = vsel %vm269, %v268, %v266
    %v271 = vadd.s32 %v245, 4294967240
    %v272 = vperm.slane %v203, %v271
    %vm273 = vcmask 523712
    %v274 = vsel %vm273, %v272, %v270
    %v275 = vadd.s32 %v245, 4294967232
    %v276 = vperm.slane %v206, %v275
    %vm277 = vcmask 589312
    %v278 = vsel %vm277, %v276, %v274
    %v279 = vadd.s32 %v245, 4294967224
    %v280 = vperm.slane %v209, %v279
    %vm281 = vcmask 654912
    %v282 = vsel %vm281, %v280, %v278
    %v283 = vadd.s32 %v245, 4294967216
    %v284 = vperm.slane %v212, %v283
    %vm285 = vcmask 720512
    %v286 = vsel %vm285, %v284, %v282
    %v287 = vadd.s32 %v245, 4294967208
    %v288 = vperm.slane %v215, %v287
    %vm289 = vcmask 786112
    %v290 = vsel %vm289, %v288, %v286
    %v291 = vadd.s32 %v245, 4294967200
    %v292 = vperm.slane %v218, %v291
    %vm293 = vcmask 851712
    %v294 = vsel %vm293, %v292, %v290
    %v295 = vadd.s32 %v245, 4294967192
    %v296 = vperm.slane %v221, %v295
    %vm297 = vcmask 917312
    %v298 = vsel %vm297, %v296, %v294
    %v299 = vadd.s32 %v245, 4294967184
    %v300 = vperm.slane %v224, %v299
    %vm301 = vcmask 982912
    %v302 = vsel %vm301, %v300, %v298
    %v303 = vadd.s32 %v245, 4294967176
    %v304 = vperm.slane %v227, %v303
    %vm305 = vcmask 1048512
    %v306 = vsel %vm305, %v304, %v302
    %308 = vst [vmem:[#allocation7] sm:$0x1] %v306
    // Predicated region
    $region17: #{tpu_custom_call.1} parent=1 // pred_check
      _
    $region18: #{tpu_custom_call.1} parent=1 // pred_check_branch
      %310 = sbr.rel (0) target = $region20
    $region19: #{tpu_custom_call.1} parent=1 // pred_region
      %312 = vsyncadd [#allocation8], 0
      %s314 = sshll.u32 [#allocation7], 4
      %s315 = int_to_ptr.vmem [resolvable:$true] %s314
      %s316 = sshll.u32 %s4, 4
      %s317 = int_to_ptr.hbm [resolvable:$true] %s316
      %319 = dma.vmem_to_hbm [thread:$0]  %s315, 16, %s317, [#allocation8]
    $region20: #{tpu_custom_call.1} parent=1 // pred_fallthru
      _
    // Predicated region
    $region21: #{tpu_custom_call.1} parent=1 // pred_check
      _
    $region22: #{tpu_custom_call.1} parent=1 // pred_check_branch
      %321 = sbr.rel (0) target = $region24
    $region23: #{tpu_custom_call.1} parent=1 // pred_region
      %323 = dma.done [#allocation8], 16
    $region24: #{tpu_custom_call.1} parent=1 // pred_fallthru
      _
    %324 = vsyncpa [#allocation8], 1

</llo_original>
